<compile_context>
chip_gen: v7x
topology: tpu7x:2x2x1
jax: 0.10.0
libtpu: 0.0.40
codegen_flags: <defaults>
</compile_context>

<pallas_src>
import functools

import jax
import jax.numpy as jnp
from jax import lax
from jax.experimental import pallas as pl
from jax.experimental.pallas import tpu as pltpu


def _head_kernel(x_ref, wqkv_ref, o_ref, *, head_size, scale):
    # x_ref:    (BB, T, C)  — a block of BB batch elements
    # wqkv_ref: (C, 3H)     — fused [W_q | W_k | W_v]
    # o_ref:    (BB, T, H)
    x = x_ref[...]          # native dtype (f32 or bf16) straight into the MXU
    w_qkv = wqkv_ref[...]   # native dtype

    H = head_size

    # Fused QKV projection, f32 accumulation on the MXU.
    qkv = jnp.einsum(
        "btc,ch->bth", x, w_qkv, preferred_element_type=jnp.float32
    )  # (BB, T, 3H), f32

    # Slice q/k/v from the fused result; fold the 1/sqrt(H) scale into q
    # (T*H elements instead of scaling the T*T score matrix).
    q = qkv[:, :, 0 * H:1 * H] * scale
    k = qkv[:, :, 1 * H:2 * H]
    v = qkv[:, :, 2 * H:3 * H]

    # scores = q @ k^T: contract the head axis directly — no transpose materialized.
    scores = jnp.einsum(
        "bqh,bkh->bqk", q, k, preferred_element_type=jnp.float32
    )  # (BB, T, T), f32

    # Causal mask: keep lower triangle (col <= row). Column 0 is always unmasked,
    # so the -inf / exp path never produces NaN.
    T = scores.shape[1]
    row = lax.broadcasted_iota(jnp.int32, (T, T), 0)
    col = lax.broadcasted_iota(jnp.int32, (T, T), 1)
    causal = (col <= row)[None, :, :]
    scores = jnp.where(causal, scores, -jnp.inf)

    # Numerically stable softmax over the last axis; post-matmul math stays f32
    # (v5e has no bf16 VPU/EUP). Denominator reciprocal on the EUP (approx path).
    m = jnp.max(scores, axis=-1, keepdims=True)
    e = jnp.exp(scores - m)
    p = e * pl.reciprocal(jnp.sum(e, axis=-1, keepdims=True), approx=True)

    # out = softmax(scores) @ v
    out = jnp.einsum("bqk,bkh->bqh", p, v, preferred_element_type=jnp.float32)
    o_ref[...] = out.astype(o_ref.dtype)


def head_forward(x, w_q, w_k, w_v, *, batch_block=None):
    """x: (B, T, C); w_*: (C, H). Returns (B, T, H)."""
    B, T, C = x.shape
    H = w_q.shape[1]
    scale = float(H) ** -0.5

    # Fused QKV weight (pure setup glue): one (C, 3H) operand, one weight DMA.
    w_qkv = jnp.concatenate([w_q, w_k, w_v], axis=1)  # (C, 3H)

    if batch_block is None:
        # At most two fat grid steps: maximal per-step work, and two "parallel"
        # steps so v7x's second TensorCore is not idle. Odd / size-1 batches fall
        # back to a single whole-batch step (no padding games needed).
        batch_block = B // 2 if (B >= 2 and B % 2 == 0) else B
    assert B % batch_block == 0, "batch_block must divide B"
    n_blocks = B // batch_block

    kernel = functools.partial(_head_kernel, head_size=H, scale=scale)

    return pl.pallas_call(
        kernel,
        out_shape=jax.ShapeDtypeStruct((B, T, H), x.dtype),
        grid_spec=pltpu.PrefetchScalarGridSpec(
            num_scalar_prefetch=0,
            grid=(n_blocks,),
            in_specs=[
                pl.BlockSpec((batch_block, T, C), lambda i: (i, 0, 0)),  # x block
                pl.BlockSpec((C, 3 * H), lambda i: (0, 0)),              # fused W_qkv
            ],
            out_specs=pl.BlockSpec((batch_block, T, H), lambda i: (i, 0, 0)),
        ),
        compiler_params=pltpu.CompilerParams(
            dimension_semantics=("parallel",),
            vmem_limit_bytes=64 * 1024 * 1024,  # dense T x T path headroom; <= v7x physical
        ),
    )(x, w_qkv)


def head_reference(x, w_q, w_k, w_v):
    """Pure-JAX reference matching the PyTorch forward (eval mode)."""
    H = w_q.shape[1]
    q = x @ w_q
    k = x @ w_k
    v = x @ w_v
    scores = (q @ jnp.swapaxes(k, -1, -2)) * (H ** -0.5)
    T = x.shape[1]
    mask = jnp.tril(jnp.ones((T, T), dtype=bool))
    scores = jnp.where(mask, scores, -jnp.inf)
    w = jax.nn.softmax(scores, axis=-1)
    return w @ v


if __name__ == "__main__":
    # Small shapes consistent with the module's forward:
    # B=2 batches, T=8 tokens (<= block_size=256), C=32 embeddings, head_size=16.
    B, T, C, HEAD = 2, 8, 32, 16

    key = jax.random.PRNGKey(0)
    kx, kq, kk, kv = jax.random.split(key, 4)

    x = jax.random.normal(kx, (B, T, C), dtype=jnp.float32)

    # Deterministic nn.Linear-style init: U(-1/sqrt(C), 1/sqrt(C)), stored as (C, H).
    bound = 1.0 / (C ** 0.5)
    w_q = jax.random.uniform(kq, (C, HEAD), jnp.float32, -bound, bound)
    w_k = jax.random.uniform(kk, (C, HEAD), jnp.float32, -bound, bound)
    w_v = jax.random.uniform(kv, (C, HEAD), jnp.float32, -bound, bound)

    out = jax.block_until_ready(head_forward(x, w_q, w_k, w_v))
    ref = head_reference(x, w_q, w_k, w_v)

    assert out.shape == (B, T, HEAD)
    # approx=True reciprocal in the softmax (EUP vrcp) is slightly looser than exact
    # division; 2e-2 still catches any real masking / matmul / ordering bug.
    assert jnp.allclose(out, ref, atol=2e-2, rtol=2e-2), "mismatch vs reference"

    print("KERNEL_OK")
</pallas_src>

<mosaic_0001>
module attributes {stable_mosaic.version = 11 : i64} {
  func.func @_head_kernel(%arg0: i32, %arg1: memref<1x8x32xf32, #tpu.memory_space<vmem>>, %arg2: memref<32x48xf32, #tpu.memory_space<vmem>>, %arg3: memref<1x8x16xf32, #tpu.memory_space<vmem>>) attributes {dimension_semantics = [#tpu.dimension_semantics<parallel>], iteration_bounds = array<i64: 2>, scalar_prefetch = 0 : i64, scratch_operands = 0 : i64, tpu.core_type = #tpu.core_type<tc>, window_params = [{transform_indices = @transform_0, window_bounds = array<i64: 1, 8, 32>}, {pipeline_mode = #tpu.pipeline_mode<synchronous>, transform_indices = @transform_1, window_bounds = array<i64: 32, 48>}, {transform_indices = @transform_2, window_bounds = array<i64: 1, 8, 16>}]} {
    %c0 = arith.constant 0 : index
    %c0_0 = arith.constant 0 : index
    %c0_1 = arith.constant 0 : index
    %0 = vector.load %arg1[%c0, %c0_0, %c0_1] : memref<1x8x32xf32, #tpu.memory_space<vmem>>, vector<1x8x32xf32>
    %c0_2 = arith.constant 0 : index
    %c0_3 = arith.constant 0 : index
    %1 = vector.load %arg2[%c0_2, %c0_3] : memref<32x48xf32, #tpu.memory_space<vmem>>, vector<32x48xf32>
    "tpu.trace_start"() <{level = 10 : i32, message = "btc,ch->bth"}> : () -> ()
    %cst = arith.constant dense<0.000000e+00> : vector<1x8x48xf32>
    %2 = tpu.matmul %0, %1, %cst {dimension_numbers = #tpu.dot_dimension_numbers<[2], [0], [0, 1], [1], [0, 0, 0, 1, 1, 1], [], []>} : vector<1x8x32xf32>, vector<32x48xf32>, vector<1x8x48xf32> -> vector<1x8x48xf32>
    "tpu.trace_stop"() : () -> ()
    %3 = vector.extract_strided_slice %2 {offsets = [0, 0, 0], sizes = [1, 8, 16], strides = [1, 1, 1]} : vector<1x8x48xf32> to vector<1x8x16xf32>
    %cst_4 = arith.constant 2.500000e-01 : f32
    %4 = vector.broadcast %cst_4 : f32 to vector<1x8x16xf32>
    %5 = arith.mulf %3, %4 : vector<1x8x16xf32>
    %6 = vector.extract_strided_slice %2 {offsets = [0, 0, 16], sizes = [1, 8, 16], strides = [1, 1, 1]} : vector<1x8x48xf32> to vector<1x8x16xf32>
    %7 = vector.extract_strided_slice %2 {offsets = [0, 0, 32], sizes = [1, 8, 16], strides = [1, 1, 1]} : vector<1x8x48xf32> to vector<1x8x16xf32>
    "tpu.trace_start"() <{level = 10 : i32, message = "bqh,bkh->bqk"}> : () -> ()
    %cst_5 = arith.constant dense<0.000000e+00> : vector<1x8x8xf32>
    %8 = tpu.matmul %5, %6, %cst_5 {dimension_numbers = #tpu.dot_dimension_numbers<[2], [2], [1], [1], [0, 0, 0, 1, 1, 1], [0], [0]>} : vector<1x8x16xf32>, vector<1x8x16xf32>, vector<1x8x8xf32> -> vector<1x8x8xf32>
    "tpu.trace_stop"() : () -> ()
    %9 = tpu.iota {dimensions = array<i32: 0>} : vector<8x8xi32>
    %10 = tpu.iota {dimensions = array<i32: 1>} : vector<8x8xi32>
    %11 = arith.cmpi sle, %10, %9 : vector<8x8xi32>
    %12 = vector.shape_cast %11 : vector<8x8xi1> to vector<1x8x8xi1>
    %cst_6 = arith.constant 0xFF800000 : f32
    %13 = vector.broadcast %cst_6 : f32 to vector<1x8x8xf32>
    %14 = arith.select %12, %8, %13 : vector<1x8x8xi1>, vector<1x8x8xf32>
    %cst_7 = arith.constant dense<0xFF800000> : vector<1x8xf32>
    %15 = vector.multi_reduction <maximumf>, %14, %cst_7 [2] : vector<1x8x8xf32> to vector<1x8xf32>
    %16 = vector.shape_cast %15 : vector<1x8xf32> to vector<1x8x1xf32>
    %17 = vector.broadcast %16 : vector<1x8x1xf32> to vector<1x8x8xf32>
    %18 = arith.subf %14, %17 : vector<1x8x8xf32>
    %19 = math.exp %18 : vector<1x8x8xf32>
    %cst_8 = arith.constant dense<0.000000e+00> : vector<1x8xf32>
    %20 = vector.multi_reduction <add>, %19, %cst_8 [2] : vector<1x8x8xf32> to vector<1x8xf32>
    %21 = vector.shape_cast %20 : vector<1x8xf32> to vector<1x8x1xf32>
    %22 = tpu.reciprocal %21 {approx = true} : vector<1x8x1xf32> -> vector<1x8x1xf32>
    %23 = vector.broadcast %22 : vector<1x8x1xf32> to vector<1x8x8xf32>
    %24 = arith.mulf %19, %23 : vector<1x8x8xf32>
    "tpu.trace_start"() <{level = 10 : i32, message = "bqk,bkh->bqh"}> : () -> ()
    %cst_9 = arith.constant dense<0.000000e+00> : vector<1x8x16xf32>
    %25 = tpu.matmul %24, %7, %cst_9 {dimension_numbers = #tpu.dot_dimension_numbers<[2], [1], [1], [2], [0, 0, 0, 1, 1, 2], [0], [0]>} : vector<1x8x8xf32>, vector<1x8x16xf32>, vector<1x8x16xf32> -> vector<1x8x16xf32>
    "tpu.trace_stop"() : () -> ()
    %c0_10 = arith.constant 0 : index
    %c0_11 = arith.constant 0 : index
    %c0_12 = arith.constant 0 : index
    %26 = vector.load %arg3[%c0_10, %c0_11, %c0_12] : memref<1x8x16xf32, #tpu.memory_space<vmem>>, vector<1x8x16xf32>
    tpu.vector_store %arg3[%c0_10, %c0_11, %c0_12], %25 {strides = array<i32>} : memref<1x8x16xf32, #tpu.memory_space<vmem>>, vector<1x8x16xf32>,
    return
  }
  func.func @transform_0(%arg0: i32) -> (i32, i32, i32) {
    %c0_i32 = arith.constant 0 : i32
    %c0_i32_0 = arith.constant 0 : i32
    %c0_i32_1 = arith.constant 0 : i32
    return %arg0, %c0_i32, %c0_i32_0 : i32, i32, i32
  }
  func.func @transform_1(%arg0: i32) -> (i32, i32) {
    %c0_i32 = arith.constant 0 : i32
    %c0_i32_0 = arith.constant 0 : i32
    %c0_i32_1 = arith.constant 0 : i32
    return %c0_i32, %c0_i32_0 : i32, i32
  }
  func.func @transform_2(%arg0: i32) -> (i32, i32, i32) {
    %c0_i32 = arith.constant 0 : i32
    %c0_i32_0 = arith.constant 0 : i32
    %c0_i32_1 = arith.constant 0 : i32
    return %arg0, %c0_i32, %c0_i32_0 : i32, i32, i32
  }
}

</mosaic_0001>

<llo_original>
// kernel: tpu_custom_call.1
$region0: #{tpu_custom_call.1}
  #allocation0 [shape = 'u32[]', space=smem, size = 0x4, offset = 0x4, fixed_abs, tag = 'smem constant byte address 0x4 - core index']
  #allocation1 [shape = 'u32[144,128]{1,0:T(1,128)}', space=vmem, size = 0x12000, scoped, tag = 'internal scratch']
  %s0 = inlined_call_operand.hbm [shape: f32[2,8,32], index: 0, kind: input, shape index: {}]
  %s1 = inlined_call_operand.hbm [shape: f32[32,48], index: 1, kind: input, shape index: {}]
  %s2 = inlined_call_operand.hbm [shape: f32[2,8,16], index: 2, kind: output, shape index: {}]
  %s3 = sld [smem:[#allocation0]]
  $region49: #{tpu_custom_call.1} parent=0
    _
  %s5 = ssub.s32 1, %s3
  %s6 = scalar_select 0, %s5, %s3
  $region1: #{tpu_custom_call.1} parent=0
    #allocation2 [shape = 'u8[8192]{0}', space=vmem, size = 0x2000, scoped, tag = 'input window, operand 0']
    #allocation3 [shape = 's32[2]{0}', space=sflag, size = 0x8, scoped, tag = 'scoped memory for tpu_custom_call.1']
    #allocation4 [shape = 's32[2]{0}', space=sflag, size = 0x8, scoped, tag = 'scoped memory for tpu_custom_call.1']
    #allocation5 [shape = 'u8[16384]{0}', space=vmem, size = 0x4000, scoped, tag = 'input window, operand 1, single buffered']
    #allocation6 [shape = 's32[1]{0}', space=sflag, size = 0x4, scoped, tag = 'scoped memory for tpu_custom_call.1']
    #allocation7 [shape = 'u8[8192]{0}', space=vmem, size = 0x2000, scoped, tag = 'output window, operand 0']
    %7 = vsyncpa [#allocation3], 0
    %s8 = scalar_lea.sflag [#allocation3], 1
    %9 = vsyncpa %s8, 0
    %10 = vsyncpa [#allocation6], 0
    %11 = vsyncpa [#allocation4], 0
    %s12 = scalar_lea.sflag [#allocation4], 1
    %13 = vsyncpa %s12, 0
    loop: start=0, step=1, limit=4
    $region2: #{tpu_custom_call.1} parent=1 // loop_pre_header
      _
    $region3: #{tpu_custom_call.1} parent=1 // loop_header
      %s15 = sphi 0, %s19
      %p16 = scmp.ge.s32.totalorder %s15, 4
      %s25 = sphi 0, %s27
      %s28 = sphi 0, %s25
      %s29 = sphi 0, %s28
      %s45 = sphi 0, %s29
      %s49 = sphi 0, %s49
      %s51 = sphi 0, %s49
      %s52 = sphi 0, %s51
      %s66 = sphi 0, %s52
      %s72 = sphi 0, %s74
      %s75 = sphi 0, %s72
      %s76 = sphi 0, %s75
      %s92 = sphi 0, %s76
    $region4: #{tpu_custom_call.1} parent=1 // loop_header_branch
      %18 = sbr.rel (%p16) target = $region8
    $region5: #{tpu_custom_call.1} parent=1 // loop_body
      %s20 = ssub.s32 %s15, 1
      %s21 = ssub.s32 %s15, 2
      %s22 = sadd.s32 %s15, 1
      %s23 = ssub.s32 %s15, %s22
      %p24 = scmp.eq.s32.totalorder %s23, 0
      %s26 = sadd.s32 %s25, 1
      %s27 = scalar_select %p24, %s25, %s26
      %p30 = pneg %p24
      %p31 = scmp.eq.s32.totalorder %s15, 1
      %p32 = por %p30, %p31
      %p33 = scmp.ne.s32.totalorder %s25, %s28
      %p34 = scmp.eq.s32.totalorder %s15, 0
      %p35 = por %p33, %p34
      %p36 = scmp.ne.s32.totalorder %s25, %s28
      %p37 = scmp.eq.s32.totalorder %s20, 1
      %p38 = por %p36, %p37
      %p39 = scmp.ne.s32.totalorder %s28, %s29
      %p40 = scmp.eq.s32.totalorder %s20, 0
      %p41 = por %p39, %p40
      %p42 = scmp.ne.s32.totalorder %s28, %s29
      %p43 = scmp.eq.s32.totalorder %s21, 1
      %p44 = por %p42, %p43
      %p46 = scmp.ne.s32.totalorder %s29, %s45
      %p47 = scmp.eq.s32.totalorder %s21, 0
      %p48 = por %p46, %p47
      %s50 = sadd.s32 %s49, 1
      %p53 = scmp.eq.s32.totalorder %s15, 1
      %p54 = scmp.ne.s32.totalorder %s49, %s51
      %p55 = scmp.eq.s32.totalorder %s15, 0
      %p56 = por %p54, %p55
      %p57 = scmp.ne.s32.totalorder %s49, %s51
      %p58 = scmp.eq.s32.totalorder %s20, 1
      %p59 = por %p57, %p58
      %p60 = scmp.ne.s32.totalorder %s51, %s52
      %p61 = scmp.eq.s32.totalorder %s20, 0
      %p62 = por %p60, %p61
      %p63 = scmp.ne.s32.totalorder %s51, %s52
      %p64 = scmp.eq.s32.totalorder %s21, 1
      %p65 = por %p63, %p64
      %p67 = scmp.ne.s32.totalorder %s52, %s66
      %p68 = scmp.eq.s32.totalorder %s21, 0
      %p69 = por %p67, %p68
      %s70 = ssub.s32 %s15, %s22
      %p71 = scmp.eq.s32.totalorder %s70, 0
      %s73 = sadd.s32 %s72, 1
      %s74 = scalar_select %p71, %s72, %s73
      %p77 = pneg %p71
      %p78 = scmp.eq.s32.totalorder %s15, 1
      %p79 = por %p77, %p78
      %p80 = scmp.ne.s32.totalorder %s72, %s75
      %p81 = scmp.eq.s32.totalorder %s15, 0
      %p82 = por %p80, %p81
      %p83 = scmp.ne.s32.totalorder %s72, %s75
      %p84 = scmp.eq.s32.totalorder %s20, 1
      %p85 = por %p83, %p84
      %p86 = scmp.ne.s32.totalorder %s75, %s76
      %p87 = scmp.eq.s32.totalorder %s20, 0
      %p88 = por %p86, %p87
      %p89 = scmp.ne.s32.totalorder %s75, %s76
      %p90 = scmp.eq.s32.totalorder %s21, 1
      %p91 = por %p89, %p90
      %p93 = scmp.ne.s32.totalorder %s76, %s92
      %p94 = scmp.eq.s32.totalorder %s21, 0
      %p95 = por %p93, %p94
      %p96 = scmp.le.s32.totalorder 1, %s15
      %p97 = scmp.lt.s32.totalorder %s15, 3
      %p98 = pnand %p96, %p97
      %p99 = pneg %p98
      // Predicated region
      $region9: #{tpu_custom_call.1} parent=5 // pred_check
        _
      $region10: #{tpu_custom_call.1} parent=5 // pred_check_branch
        %101 = sbr.rel (%p98) target = $region12
      $region11: #{tpu_custom_call.1} parent=5 // pred_region
        %s102 = ssub.s32 %s15, 1
        // Predicated region
        $region13: #{tpu_custom_call.1} parent=11 // pred_check
          %p103 = pneg %p62
        $region14: #{tpu_custom_call.1} parent=11 // pred_check_branch
          %105 = sbr.rel (%p103) target = $region16
        $region15: #{tpu_custom_call.1} parent=11 // pred_region
          %s107 = ssub.s32 512, 512
          %108 = vsyncadd [#allocation6], %s107
          %s109 = sshll.u32 [#allocation5], 4
          %s110 = int_to_ptr.vmem [resolvable:$true] %s109
          %115 = dma.hbm_to_vmem [thread:$0]  %s1, 512, %s110, [#allocation6], 128, 128, 8
        $region16: #{tpu_custom_call.1} parent=11 // pred_fallthru
          _
      $region12: #{tpu_custom_call.1} parent=5 // pred_fallthru
        _
      %p116 = scmp.lt.s32.totalorder %s15, 2
      // Predicated region
      $region17: #{tpu_custom_call.1} parent=5 // pred_check
        %p117 = pneg %p116
      $region18: #{tpu_custom_call.1} parent=5 // pred_check_branch
        %119 = sbr.rel (%p117) target = $region20
      $region19: #{tpu_custom_call.1} parent=5 // pred_region
        // Predicated region
        $region21: #{tpu_custom_call.1} parent=19 // pred_check
          %p120 = pneg %p35
        $region22: #{tpu_custom_call.1} parent=19 // pred_check_branch
          %122 = sbr.rel (%p120) target = $region24
        $region23: #{tpu_custom_call.1} parent=19 // pred_region
          %s123 = sand.u32 %s25, 1
          %s124 = scalar_lea.sflag [#allocation3], %s123
          %s125 = sand.u32 %s25, 1
          %s126 = smul.addr %s125, 8
          %s127 = scalar_lea.vmem [#allocation2], %s126
          %s129 = ssub.s32 128, 128
          %130 = vsyncadd %s124, %s129
          %s131 = smul.addr %s15, 128
          %s132 = scalar_lea.hbm %s0, %s131
          %s134 = sshll.u32 %s127, 4
          %s135 = int_to_ptr.vmem [resolvable:$true] %s134
          %137 = dma.hbm_to_vmem [thread:$0]  %s132, 128, %s135, %s124
        $region24: #{tpu_custom_call.1} parent=19 // pred_fallthru
          _
      $region20: #{tpu_custom_call.1} parent=5 // pred_fallthru
        _
      %p138 = scmp.le.s32.totalorder 1, %s15
      %p139 = scmp.lt.s32.totalorder %s15, 3
      %p140 = pnand %p138, %p139
      %p141 = pneg %p140
      // Predicated region
      $region25: #{tpu_custom_call.1} parent=5 // pred_check
        _
      $region26: #{tpu_custom_call.1} parent=5 // pred_check_branch
        %143 = sbr.rel (%p140) target = $region28
      $region27: #{tpu_custom_call.1} parent=5 // pred_region
        %s144 = ssub.s32 %s15, 1
        %s145 = sand.u32 %s28, 1
        %s146 = scalar_lea.sflag [#allocation3], %s145
        %s147 = sand.u32 %s28, 1
        %s148 = smul.addr %s147, 8
        %s149 = scalar_lea.vmem [#allocation2], %s148
        // Predicated region
        $region29: #{tpu_custom_call.1} parent=27 // pred_check
          %p150 = pneg %p41
        $region30: #{tpu_custom_call.1} parent=27 // pred_check_branch
          %152 = sbr.rel (%p150) target = $region32
        $region31: #{tpu_custom_call.1} parent=27 // pred_region
          %153 = dma.done %s146, 128
        $region32: #{tpu_custom_call.1} parent=27 // pred_fallthru
          _
        // Predicated region
        $region33: #{tpu_custom_call.1} parent=27 // pred_check
          %p154 = pneg %p62
        $region34: #{tpu_custom_call.1} parent=27 // pred_check_branch
          %156 = sbr.rel (%p154) target = $region36
        $region35: #{tpu_custom_call.1} parent=27 // pred_region
          %157 = dma.done [#allocation6], 512
        $region36: #{tpu_custom_call.1} parent=27 // pred_fallthru
          _
        %s158 = sand.u32 %s28, 1
        %s159 = scalar_lea.sflag [#allocation3], %s158
        %s160 = sand.u32 %s28, 1
        %s161 = smul.addr %s160, 8
        %s162 = scalar_lea.vmem [#allocation2], %s161
        %p163 = pneg %p41
        %p164 = pneg %p38
        %p165 = pneg %p62
        %p166 = pneg %p59
        %p167 = pneg %p88
        %p168 = pneg %p85
        %s169 = sand.u32 %s75, 1
        %s170 = scalar_lea.sflag [#allocation4], %s169
        %s171 = sand.u32 %s75, 1
        %s172 = smul.addr %s171, 8
        %s173 = scalar_lea.vmem [#allocation7], %s172
        %v174 = vld [vmem:[%s149] sm:$0xff]
        %v175 = vld [vmem:[#allocation5] sm:$0xff]
        %v176 = vld [vmem:[#allocation5 + $0x8] sm:$0xff]
        %v177 = vld [vmem:[#allocation5 + $0x10] sm:$0xff]
        %v178 = vld [vmem:[#allocation5 + $0x18] sm:$0xff]
        %vm179 = vcmask 261120
        %v181 = vsel %vm179, %v174, 0
        %183 = vmatprep.subr.mxu0 0.0
        %184 = vmatpush1.msra.mxu0 %v175
        %185 = vmatprep.subr.mxu0 0.0
        %186 = vmatpush1.msra.mxu0 %v176
        %187 = vmatprep.subr.mxu0 0.0
        %188 = vmatpush1.msra.mxu0 %v177
        %189 = vmatprep.subr.mxu0 0.0
        %190 = vmatpush1.msra.mxu0 %v178
        %191 = vmatprep.subr.mxu0 0.0
        %192 = vmatpush1.msra.mxu0 0.0
        %193 = vmatprep.subr.mxu0 0.0
        %194 = vmatpush1.msra.mxu0 0.0
        %195 = vmatprep.subr.mxu0 0.0
        %196 = vmatpush1.msra.mxu0 0.0
        %197 = vmatprep.subr.mxu0 0.0
        %198 = vmatpush1.msra.mxu0 0.0
        %199 = vmatprep.subr.mxu0 0.0
        %200 = vmatpush1.msra.mxu0 0.0
        %201 = vmatprep.subr.mxu0 0.0
        %202 = vmatpush1.msra.mxu0 0.0
        %203 = vmatprep.subr.mxu0 0.0
        %204 = vmatpush1.msra.mxu0 0.0
        %205 = vmatprep.subr.mxu0 0.0
        %206 = vmatpush1.msra.mxu0 0.0
        %207 = vmatprep.subr.mxu0 0.0
        %208 = vmatpush1.msra.mxu0 0.0
        %209 = vmatprep.subr.mxu0 0.0
        %210 = vmatpush1.msra.mxu0 0.0
        %211 = vmatprep.subr.mxu0 0.0
        %212 = vmatpush1.msra.mxu0 0.0
        %213 = vmatprep.subr.mxu0 0.0
        %214 = vmatpush1.msra.mxu0 0.0
        %215 = vmatprep.subr.mxu0 0.0
        %216 = vmatpush1.msra.mxu0 0.0
        %217 = vmatprep.subr.mxu0 0.0
        %218 = vmatpush1.msra.mxu0 0.0
        %219 = vmatprep.subr.mxu0 0.0
        %220 = vmatpush1.msra.mxu0 0.0
        %221 = vmatprep.subr.mxu0 0.0
        %222 = vmatpush1.msra.mxu0 0.0
        %223 = vmatprep.subr.mxu0 0.0
        %224 = vmatpush1.msra.mxu0 0.0
        %225 = vmatprep.subr.mxu0 0.0
        %226 = vmatpush1.msra.mxu0 0.0
        %227 = vmatprep.subr.mxu0 0.0
        %228 = vmatpush1.msra.mxu0 0.0
        %229 = vmatprep.subr.mxu0 0.0
        %230 = vmatpush1.msra.mxu0 0.0
        %231 = vmatprep.subr.mxu0 0.0
        %232 = vmatpush1.msra.mxu0 0.0
        %233 = vmatprep.subr.mxu0 0.0
        %234 = vmatpush1.msra.mxu0 0.0
        %235 = vmatprep.subr.mxu0 0.0
        %236 = vmatpush1.msra.mxu0 0.0
        %237 = vmatprep.subr.mxu0 0.0
        %238 = vmatpush1.msra.mxu0 0.0
        %239 = vmatprep.subr.mxu0 0.0
        %240 = vmatpush1.msra.mxu0 0.0
        %241 = vmatprep.subr.mxu0 0.0
        %242 = vmatpush1.msra.mxu0 0.0
        %243 = vmatprep.subr.mxu0 0.0
        %244 = vmatpush1.msra.mxu0 0.0
        %245 = vmatprep.subr.mxu0 0.0
        %246 = vmatpush1.msra.mxu0 0.0
        %247 = vmatprep.mubr.f32.mxu0 0.0
        %248 = vmatmul.mubr.f32.gmra.mrb[0].mxu0 %v181
        %v249 = vpop.f32.mrb[0].mxu0
        %v250 = vadd.f32 0.0, %v249
        %v251 = vpop.f32.mrb[0].mxu0
        %252 = vdwg.mxu0
        %v253 = vmul.f32 %v250, 0.25
        %255 = vrot.lane.b32.xlu0 %v250, 112
        %v256 = vpop.permute.xlu0 %255
        %vm257 = vcmask 130048
        %v259 = vsel %vm257, %v253, 0
        %v261 = vsel %vm257, %v256, 0
        %263 = vmatprep.subr.mxu0 0.0
        %264 = vmatpush1.xpose.msra.mxu0 %v261
        %265 = vmatprep.subr.mxu0 0.0
        %266 = vmatpush1.xpose.msra.mxu0 0.0
        %267 = vmatprep.subr.mxu0 0.0
        %268 = vmatpush1.xpose.msra.mxu0 0.0
        %269 = vmatprep.subr.mxu0 0.0
        %270 = vmatpush1.xpose.msra.mxu0 0.0
        %271 = vmatprep.subr.mxu0 0.0
        %272 = vmatpush1.xpose.msra.mxu0 0.0
        %273 = vmatprep.subr.mxu0 0.0
        %274 = vmatpush1.xpose.msra.mxu0 0.0
        %275 = vmatprep.subr.mxu0 0.0
        %276 = vmatpush1.xpose.msra.mxu0 0.0
        %277 = vmatprep.subr.mxu0 0.0
        %278 = vmatpush1.xpose.msra.mxu0 0.0
        %279 = vmatprep.subr.mxu0 0.0
        %280 = vmatpush1.xpose.msra.mxu0 0.0
        %281 = vmatprep.subr.mxu0 0.0
        %282 = vmatpush1.xpose.msra.mxu0 0.0
        %283 = vmatprep.subr.mxu0 0.0
        %284 = vmatpush1.xpose.msra.mxu0 0.0
        %285 = vmatprep.subr.mxu0 0.0
        %286 = vmatpush1.xpose.msra.mxu0 0.0
        %287 = vmatprep.subr.mxu0 0.0
        %288 = vmatpush1.xpose.msra.mxu0 0.0
        %289 = vmatprep.subr.mxu0 0.0
        %290 = vmatpush1.xpose.msra.mxu0 0.0
        %291 = vmatprep.subr.mxu0 0.0
        %292 = vmatpush1.xpose.msra.mxu0 0.0
        %293 = vmatprep.subr.mxu0 0.0
        %294 = vmatpush1.xpose.msra.mxu0 0.0
        %295 = vmatprep.subr.mxu0 0.0
        %296 = vmatpush1.xpose.msra.mxu0 0.0
        %297 = vmatprep.subr.mxu0 0.0
        %298 = vmatpush1.xpose.msra.mxu0 0.0
        %299 = vmatprep.subr.mxu0 0.0
        %300 = vmatpush1.xpose.msra.mxu0 0.0
        %301 = vmatprep.subr.mxu0 0.0
        %302 = vmatpush1.xpose.msra.mxu0 0.0
        %303 = vmatprep.subr.mxu0 0.0
        %304 = vmatpush1.xpose.msra.mxu0 0.0
        %305 = vmatprep.subr.mxu0 0.0
        %306 = vmatpush1.xpose.msra.mxu0 0.0
        %307 = vmatprep.subr.mxu0 0.0
        %308 = vmatpush1.xpose.msra.mxu0 0.0
        %309 = vmatprep.subr.mxu0 0.0
        %310 = vmatpush1.xpose.msra.mxu0 0.0
        %311 = vmatprep.subr.mxu0 0.0
        %312 = vmatpush1.xpose.msra.mxu0 0.0
        %313 = vmatprep.subr.mxu0 0.0
        %314 = vmatpush1.xpose.msra.mxu0 0.0
        %315 = vmatprep.subr.mxu0 0.0
        %316 = vmatpush1.xpose.msra.mxu0 0.0
        %317 = vmatprep.subr.mxu0 0.0
        %318 = vmatpush1.xpose.msra.mxu0 0.0
        %319 = vmatprep.subr.mxu0 0.0
        %320 = vmatpush1.xpose.msra.mxu0 0.0
        %321 = vmatprep.subr.mxu0 0.0
        %322 = vmatpush1.xpose.msra.mxu0 0.0
        %323 = vmatprep.subr.mxu0 0.0
        %324 = vmatpush1.xpose.msra.mxu0 0.0
        %325 = vmatprep.subr.mxu0 0.0
        %326 = vmatpush1.xpose.msra.mxu0 0.0
        %327 = vmatprep.mubr.f32.mxu0 0.0
        %328 = vmatmul.mubr.f32.gmra.mrb[0].mxu0 %v259
        %v329 = vpop.f32.mrb[0].mxu0
        %v330 = vadd.f32 0.0, %v329
        %v331 = vpop.f32.mrb[0].mxu0
        %332 = vdwg.mxu0
        %v333 = vlaneseq
        %v334 = vshrl.u32 %v333, 7
        %v335 = vlaneseq
        %v336 = vand.u32 %v335, 127
        %vm337 = vcmp.le.s32.totalorder %v336, %v334
        %v338 = vsel %vm337, %v330, -inf
        %vm339 = vcmask 64512
        %v340 = vsel %vm339, %v338, -inf
        %341 = vmax.xlane.f32.xlu0 %v340
        %v342 = vpop.xlane.xlu0 %341
        %v343 = vsub.f32 %v338, %v342
        %v344 = vmul.f32 %v343, 1.442695
        %v345 = vpow.pop %v344
        %v346 = vsel %vm339, %v345, 0.0
        %347 = vadd.xlane.f32.xlu0 %v346
        %v348 = vpop.xlane.xlu0 %347
        %v349 = vrcp.pop %v348
        %v350 = vmul.f32 %v345, %v349
        %351 = vrot.lane.b32.xlu0 %v250, 96
        %v352 = vpop.permute.xlu0 %351
        %v355 = vsel %vm339, %v350, 0
        %357 = vmatprep.subr.mxu0 0.0
        %358 = vmatpush1.msra.mxu0 %v352
        %359 = vmatprep.subr.mxu0 0.0
        %360 = vmatpush1.msra.mxu0 0.0
        %361 = vmatprep.subr.mxu0 0.0
        %362 = vmatpush1.msra.mxu0 0.0
        %363 = vmatprep.subr.mxu0 0.0
        %364 = vmatpush1.msra.mxu0 0.0
        %365 = vmatprep.subr.mxu0 0.0
        %366 = vmatpush1.msra.mxu0 0.0
        %367 = vmatprep.subr.mxu0 0.0
        %368 = vmatpush1.msra.mxu0 0.0
        %369 = vmatprep.subr.mxu0 0.0
        %370 = vmatpush1.msra.mxu0 0.0
        %371 = vmatprep.subr.mxu0 0.0
        %372 = vmatpush1.msra.mxu0 0.0
        %373 = vmatprep.subr.mxu0 0.0
        %374 = vmatpush1.msra.mxu0 0.0
        %375 = vmatprep.subr.mxu0 0.0
        %376 = vmatpush1.msra.mxu0 0.0
        %377 = vmatprep.subr.mxu0 0.0
        %378 = vmatpush1.msra.mxu0 0.0
        %379 = vmatprep.subr.mxu0 0.0
        %380 = vmatpush1.msra.mxu0 0.0
        %381 = vmatprep.subr.mxu0 0.0
        %382 = vmatpush1.msra.mxu0 0.0
        %383 = vmatprep.subr.mxu0 0.0
        %384 = vmatpush1.msra.mxu0 0.0
        %385 = vmatprep.subr.mxu0 0.0
        %386 = vmatpush1.msra.mxu0 0.0
        %387 = vmatprep.subr.mxu0 0.0
        %388 = vmatpush1.msra.mxu0 0.0
        %389 = vmatprep.subr.mxu0 0.0
        %390 = vmatpush1.msra.mxu0 0.0
        %391 = vmatprep.subr.mxu0 0.0
        %392 = vmatpush1.msra.mxu0 0.0
        %393 = vmatprep.subr.mxu0 0.0
        %394 = vmatpush1.msra.mxu0 0.0
        %395 = vmatprep.subr.mxu0 0.0
        %396 = vmatpush1.msra.mxu0 0.0
        %397 = vmatprep.subr.mxu0 0.0
        %398 = vmatpush1.msra.mxu0 0.0
        %399 = vmatprep.subr.mxu0 0.0
        %400 = vmatpush1.msra.mxu0 0.0
        %401 = vmatprep.subr.mxu0 0.0
        %402 = vmatpush1.msra.mxu0 0.0
        %403 = vmatprep.subr.mxu0 0.0
        %404 = vmatpush1.msra.mxu0 0.0
        %405 = vmatprep.subr.mxu0 0.0
        %406 = vmatpush1.msra.mxu0 0.0
        %407 = vmatprep.subr.mxu0 0.0
        %408 = vmatpush1.msra.mxu0 0.0
        %409 = vmatprep.subr.mxu0 0.0
        %410 = vmatpush1.msra.mxu0 0.0
        %411 = vmatprep.subr.mxu0 0.0
        %412 = vmatpush1.msra.mxu0 0.0
        %413 = vmatprep.subr.mxu0 0.0
        %414 = vmatpush1.msra.mxu0 0.0
        %415 = vmatprep.subr.mxu0 0.0
        %416 = vmatpush1.msra.mxu0 0.0
        %417 = vmatprep.subr.mxu0 0.0
        %418 = vmatpush1.msra.mxu0 0.0
        %419 = vmatprep.subr.mxu0 0.0
        %420 = vmatpush1.msra.mxu0 0.0
        %421 = vmatprep.mubr.f32.mxu0 0.0
        %422 = vmatmul.mubr.f32.gmra.mrb[0].mxu0 %v355
        %v423 = vpop.f32.mrb[0].mxu0
        %v424 = vadd.f32 0.0, %v423
        %v425 = vpop.f32.mrb[0].mxu0
        %426 = vdwg.mxu0
        %427 = vst.msk [vmem:[%s173] sm:$0xff] %vm257, %v424
        %s428 = sand.u32 %s75, 1
        %s429 = scalar_lea.sflag [#allocation4], %s428
        %s430 = sand.u32 %s75, 1
        %s431 = smul.addr %s430, 8
        %s432 = scalar_lea.vmem [#allocation7], %s431
        // Predicated region
        $region37: #{tpu_custom_call.1} parent=27 // pred_check
          %p433 = pneg %p85
        $region38: #{tpu_custom_call.1} parent=27 // pred_check_branch
          %435 = sbr.rel (%p433) target = $region40
        $region39: #{tpu_custom_call.1} parent=27 // pred_region
          %s437 = ssub.s32 128, 128
          %438 = vsyncadd %s429, %s437
          %s439 = smul.addr %s20, 128
          %s440 = scalar_lea.hbm %s2, %s439
          %s442 = sshll.u32 %s432, 4
          %s443 = int_to_ptr.vmem [resolvable:$true] %s442
          %445 = dma.vmem_to_hbm [thread:$0]  %s443, 128, %s440, %s429
        $region40: #{tpu_custom_call.1} parent=27 // pred_fallthru
          _
      $region28: #{tpu_custom_call.1} parent=5 // pred_fallthru
        _
      %p446 = scmp.le.s32.totalorder 2, %s15
      // Predicated region
      $region41: #{tpu_custom_call.1} parent=5 // pred_check
        %p447 = pneg %p446
      $region42: #{tpu_custom_call.1} parent=5 // pred_check_branch
        %449 = sbr.rel (%p447) target = $region44
      $region43: #{tpu_custom_call.1} parent=5 // pred_region
        %s450 = ssub.s32 %s15, 2
        // Predicated region
        $region45: #{tpu_custom_call.1} parent=43 // pred_check
          %p451 = pneg %p91
        $region46: #{tpu_custom_call.1} parent=43 // pred_check_branch
          %453 = sbr.rel (%p451) target = $region48
        $region47: #{tpu_custom_call.1} parent=43 // pred_region
          %s454 = sand.u32 %s76, 1
          %s455 = scalar_lea.sflag [#allocation4], %s454
          %s456 = sand.u32 %s76, 1
          %s457 = smul.addr %s456, 8
          %s458 = scalar_lea.vmem [#allocation7], %s457
          %459 = dma.done %s455, 128
        $region48: #{tpu_custom_call.1} parent=43 // pred_fallthru
          _
      $region44: #{tpu_custom_call.1} parent=5 // pred_fallthru
        _
    $region6: #{tpu_custom_call.1} parent=1 // loop_footer
      %s19 = sadd.s32 1, %s15
    $region7: #{tpu_custom_call.1} parent=1 // loop_footer_branch
      %14 = sbr.rel target = $region3
    $region8: #{tpu_custom_call.1} parent=1 // loop_exit
      _
    %460 = vsyncpa [#allocation3], 1
    %s461 = scalar_lea.sflag [#allocation3], 1
    %462 = vsyncpa %s461, 1
    %463 = vsyncpa [#allocation6], 1
    %464 = vsyncpa [#allocation4], 1
    %s465 = scalar_lea.sflag [#allocation4], 1
    %466 = vsyncpa %s465, 1

</llo_original>
